<compile_context>
chip_gen: v7x
topology: tpu7x:2x2x1
jax: 0.10.0
libtpu: 0.0.40
codegen_flags: <defaults>
</compile_context>

<pallas_src>
import functools

import jax
import jax.numpy as jnp
from jax.experimental import pallas as pl
from jax.experimental.pallas import tpu as pltpu


def _round_up(x, m):
    return (x + m - 1) // m * m


def _vmem_budget_bytes():
    """Per-core VMEM budget with headroom; never claim full physical VMEM."""
    try:
        cap = pltpu.get_tpu_info().vmem_capacity_bytes
    except Exception:
        cap = 64 * 1024 * 1024  # conservative (v7x-sized) fallback
    return max(32 * 1024 * 1024, min(cap * 3 // 4, 100 * 1024 * 1024))


def _pick_n_inner(th):
    # Sub-chunk the hidden block so dot1 / GELU / dot2 of different chunks can
    # overlap (MXU vs VPU/EUP); chunks stay lane-aligned (multiples of 128).
    for n in (4, 2):
        if th % (n * 128) == 0:
            return n
    return 1


def _vmem_bytes(tm, th, Cp, out_bytes, n_inner):
    chunk = th // n_inner
    x_b = 2 * tm * Cp * 2                 # bf16 input tile, double-buffered
    w_b = 2 * (Cp * th + th * Cp) * 2     # W1 + W2 bf16, double-buffered
    bias_b = 2 * (th + Cp) * 4            # b1 + b2 (f32)
    o_b = 2 * tm * Cp * out_bytes         # output tile, double-buffered
    acc_b = tm * Cp * 4                   # f32 accumulator scratch
    inter_b = tm * chunk * (4 + 4 + 2)    # h (f32), gelu (f32), bf16 cast
    return x_b + w_b + bias_b + o_b + acc_b + inter_b


def _choose_tiles(M, Cp, Hp, out_bytes, budget, tm_max=512):
    # Row tile: large enough to amortize per-step overhead, but leave >= 2 row
    # tiles when M allows so the "parallel" axis can shard over 2 TCs (v7x).
    tm = min(tm_max, _round_up(max((M + 1) // 2, 8), 16))
    # Hidden tile: prefer th == Hp (weights resident, fetched once); fallbacks
    # are restricted to divisors of Hp so the prepared weights never re-pad.
    th_cands = [Hp] + [t for t in (2048, 1024, 512, 256, 128)
                       if t < Hp and Hp % t == 0]
    for tm_cur in (tm, 256, 128, 64, 32, 16):
        if tm_cur > tm:
            continue
        for th in th_cands:
            n_inner = _pick_n_inner(th)
            if _vmem_bytes(tm_cur, th, Cp, out_bytes, n_inner) <= budget:
                return tm_cur, th, n_inner
    return 16, 128, 1


def mlp_kernel(x_ref, w1_ref, b1_ref, w2_ref, b2_ref, o_ref, acc_ref, *, n_inner):
    h_idx = pl.program_id(1)

    # Initialize the resident accumulator with b2 on the first hidden step.
    @pl.when(h_idx == 0)
    def _():
        acc_ref[...] = jnp.broadcast_to(
            b2_ref[...].astype(jnp.float32), acc_ref.shape)

    th = w1_ref.shape[1]
    chunk = th // n_inner
    x = x_ref[...]
    c = 0.7978845608028654  # sqrt(2/pi)

    # Static unroll over hidden sub-chunks: independent dot1->GELU->dot2 chains
    # let the LLO scheduler overlap MXU (dots) with VPU/EUP (GELU).
    for k in range(n_inner):
        sl = pl.ds(k * chunk, chunk)
        # c_fc slice: (tm, Cp) @ (Cp, chunk) -> f32 accum, + b1 in f32.
        h = jnp.dot(x, w1_ref[:, sl],
                    preferred_element_type=jnp.float32) + b1_ref[:, sl]
        # GELU(approximate='tanh') in f32 (v5e has no bf16 VPU/EUP).
        g = 0.5 * h * (1.0 + jnp.tanh(c * (h + 0.044715 * h * h * h)))
        # c_proj partial: (tm, chunk) @ (chunk, Cp) -> accumulate f32.
        acc_ref[...] += jnp.dot(g.astype(jnp.bfloat16), w2_ref[sl, :],
                                preferred_element_type=jnp.float32)

    @pl.when(h_idx == pl.num_programs(1) - 1)
    def _():
        o_ref[...] = acc_ref[...].astype(o_ref.dtype)


def prepare_mlp_params(w1, b1, w2, b2):
    """One-time per-model prep: cast weights to bf16, biases to f32, pad channel
    dims up to multiples of 128 (skipped when already aligned).  Hoisted out of
    the per-call path so the cast/pad passes are not repeated every forward.

    w1: (C, 4C), b1: (4C,), w2: (4C, C), b2: (C,) -- PyTorch weight.T layout."""
    C, H = w1.shape
    Cp, Hp = _round_up(C, 128), _round_up(H, 128)
    w1p = w1.astype(jnp.bfloat16)
    w2p = w2.astype(jnp.bfloat16)
    b1p = b1.astype(jnp.float32)
    b2p = b2.astype(jnp.float32)
    if Cp != C or Hp != H:
        w1p = jnp.pad(w1p, ((0, Cp - C), (0, Hp - H)))
        w2p = jnp.pad(w2p, ((0, Hp - H), (0, Cp - C)))
        b1p = jnp.pad(b1p, (0, Hp - H))
        b2p = jnp.pad(b2p, (0, Cp - C))
    return {"w1": w1p, "b1": b1p.reshape(1, Hp), "w2": w2p,
            "b2": b2p.reshape(1, Cp), "C": C, "H": H}


def mlp_pallas(x, params):
    """x: (B, T, C).  params: output of prepare_mlp_params. Returns (B, T, C)
    in x.dtype.  Matmuls run with bf16 inputs / f32 accumulation."""
    B, T, C = x.shape
    assert C == params["C"], "channel dim mismatch with prepared params"
    w1p, b1p, w2p, b2p = params["w1"], params["b1"], params["w2"], params["b2"]
    Cp, Hp = w1p.shape
    M = B * T
    out_dtype = x.dtype
    out_bytes = x.dtype.itemsize

    budget = _vmem_budget_bytes()
    tm, th, n_inner = _choose_tiles(M, Cp, Hp, out_bytes, budget)
    Mp = _round_up(M, tm)

    x2 = x.reshape(M, C).astype(jnp.bfloat16)
    if Mp != M or Cp != C:
        x2 = jnp.pad(x2, ((0, Mp - M), (0, Cp - C)))

    kernel = functools.partial(mlp_kernel, n_inner=n_inner)

    out_p = pl.pallas_call(
        kernel,
        out_shape=jax.ShapeDtypeStruct((Mp, Cp), out_dtype),
        grid_spec=pltpu.PrefetchScalarGridSpec(
            num_scalar_prefetch=0,
            grid=(Mp // tm, Hp // th),
            in_specs=[
                pl.BlockSpec((tm, Cp), lambda i, h: (i, 0)),   # x row tile
                pl.BlockSpec((Cp, th), lambda i, h: (0, h)),   # W1 (resident when th==Hp)
                pl.BlockSpec((1, th), lambda i, h: (0, h)),    # b1 hidden slice
                pl.BlockSpec((th, Cp), lambda i, h: (h, 0)),   # W2 (resident when th==Hp)
                pl.BlockSpec((1, Cp), lambda i, h: (0, 0)),    # b2 (acc init)
            ],
            out_specs=pl.BlockSpec((tm, Cp), lambda i, h: (i, 0)),
            scratch_shapes=[pltpu.VMEM((tm, Cp), jnp.float32)],
        ),
        compiler_params=pltpu.CompilerParams(
            dimension_semantics=("parallel", "arbitrary"),
            vmem_limit_bytes=budget,
        ),
    )(x2, w1p, b1p, w2p, b2p)

    out = out_p if (Mp == M and Cp == C) else out_p[:M, :C]
    return out.reshape(B, T, C)


def mlp_reference(x, w1, b1, w2, b2):
    h = jnp.dot(x, w1) + b1
    c = 0.7978845608028654
    g = 0.5 * h * (1.0 + jnp.tanh(c * (h + 0.044715 * h ** 3)))
    return jnp.dot(g, w2) + b2


if __name__ == "__main__":
    # Config: n_embd = 32, batch = 2, seq = 8  -> hidden = 4 * 32 = 128
    B, T, C = 2, 8, 32
    H = 4 * C

    key = jax.random.PRNGKey(0)
    kx, k1, k2, k3, k4 = jax.random.split(key, 5)

    x = jax.random.normal(kx, (B, T, C), dtype=jnp.float32)
    # Deterministic param init (PyTorch Linear-like scale), stored transposed
    # as (in, out) for the kernel.
    w1 = jax.random.uniform(k1, (C, H), jnp.float32, -1.0, 1.0) / jnp.sqrt(C)
    b1 = jax.random.uniform(k2, (H,), jnp.float32, -1.0, 1.0) / jnp.sqrt(C)
    w2 = jax.random.uniform(k3, (H, C), jnp.float32, -1.0, 1.0) / jnp.sqrt(H)
    b2 = jax.random.uniform(k4, (C,), jnp.float32, -1.0, 1.0) / jnp.sqrt(H)

    params = prepare_mlp_params(w1, b1, w2, b2)   # one-time weight cast/pad
    out = mlp_pallas(x, params)
    jax.block_until_ready(out)

    ref = mlp_reference(x, w1, b1, w2, b2)
    assert out.shape == (B, T, C)
    assert out.dtype == x.dtype
    # bf16 MXU inputs with f32 accumulation -> loosened tolerance vs f32 reference.
    assert jnp.allclose(out, ref, atol=3e-2, rtol=3e-2), (
        float(jnp.max(jnp.abs(out - ref))))

    print("KERNEL_OK")
</pallas_src>

<mosaic_0001>
module attributes {stable_mosaic.version = 11 : i64} {
  func.func @mlp_kernel(%arg0: i32, %arg1: i32, %arg2: memref<16x128xbf16, #tpu.memory_space<vmem>>, %arg3: memref<128x128xbf16, #tpu.memory_space<vmem>>, %arg4: memref<1x128xf32, #tpu.memory_space<vmem>>, %arg5: memref<128x128xbf16, #tpu.memory_space<vmem>>, %arg6: memref<1x128xf32, #tpu.memory_space<vmem>>, %arg7: memref<16x128xf32, #tpu.memory_space<vmem>>, %arg8: memref<16x128xf32, #tpu.memory_space<vmem>>) attributes {dimension_semantics = [#tpu.dimension_semantics<parallel>, #tpu.dimension_semantics<arbitrary>], iteration_bounds = array<i64: 1, 1>, scalar_prefetch = 0 : i64, scratch_operands = 1 : i64, tpu.core_type = #tpu.core_type<tc>, window_params = [{transform_indices = @transform_0, window_bounds = array<i64: 16, 128>}, {transform_indices = @transform_1, window_bounds = array<i64: 128, 128>}, {transform_indices = @transform_2, window_bounds = array<i64: 1, 128>}, {transform_indices = @transform_3, window_bounds = array<i64: 128, 128>}, {pipeline_mode = #tpu.pipeline_mode<synchronous>, transform_indices = @transform_4, window_bounds = array<i64: 1, 128>}, {transform_indices = @transform_5, window_bounds = array<i64: 16, 128>}]} {
    %c0_i32 = arith.constant 0 : i32
    %0 = arith.cmpi eq, %arg1, %c0_i32 : i32
    %1 = arith.extui %0 : i1 to i32
    %c0_i32_0 = arith.constant 0 : i32
    %2 = arith.cmpi ne, %1, %c0_i32_0 : i32
    scf.if %2 {
      %c0_19 = arith.constant 0 : index
      %c0_20 = arith.constant 0 : index
      %31 = vector.load %arg6[%c0_19, %c0_20] : memref<1x128xf32, #tpu.memory_space<vmem>>, vector<1x128xf32>
      %32 = vector.shape_cast %31 : vector<1x128xf32> to vector<1x128xf32>
      %33 = vector.broadcast %32 : vector<1x128xf32> to vector<16x128xf32>
      %c0_21 = arith.constant 0 : index
      %c0_22 = arith.constant 0 : index
      %34 = vector.load %arg8[%c0_21, %c0_22] : memref<16x128xf32, #tpu.memory_space<vmem>>, vector<16x128xf32>
      tpu.vector_store %arg8[%c0_21, %c0_22], %33 {strides = array<i32>} : memref<16x128xf32, #tpu.memory_space<vmem>>, vector<16x128xf32>,
    } else {
    }
    %c0 = arith.constant 0 : index
    %c0_1 = arith.constant 0 : index
    %3 = vector.load %arg2[%c0, %c0_1] : memref<16x128xbf16, #tpu.memory_space<vmem>>, vector<16x128xbf16>
    %c0_2 = arith.constant 0 : index
    %c0_3 = arith.constant 0 : index
    %4 = vector.load %arg3[%c0_2, %c0_3] : memref<128x128xbf16, #tpu.memory_space<vmem>>, vector<128x128xbf16>
    %cst = arith.constant dense<0.000000e+00> : vector<16x128xf32>
    %5 = tpu.matmul %3, %4, %cst {dimension_numbers = #tpu.dot_dimension_numbers<[1], [0], [0], [1], [0, 0, 1, 1], [], []>} : vector<16x128xbf16>, vector<128x128xbf16>, vector<16x128xf32> -> vector<16x128xf32>
    %c0_4 = arith.constant 0 : index
    %c0_5 = arith.constant 0 : index
    %6 = vector.load %arg4[%c0_4, %c0_5] : memref<1x128xf32, #tpu.memory_space<vmem>>, vector<1x128xf32>
    %7 = vector.broadcast %6 : vector<1x128xf32> to vector<16x128xf32>
    %8 = arith.addf %5, %7 : vector<16x128xf32>
    %cst_6 = arith.constant 5.000000e-01 : f32
    %9 = vector.broadcast %cst_6 : f32 to vector<16x128xf32>
    %10 = arith.mulf %9, %8 : vector<16x128xf32>
    %cst_7 = arith.constant 4.471500e-02 : f32
    %11 = vector.broadcast %cst_7 : f32 to vector<16x128xf32>
    %12 = arith.mulf %11, %8 : vector<16x128xf32>
    %13 = arith.mulf %12, %8 : vector<16x128xf32>
    %14 = arith.mulf %13, %8 : vector<16x128xf32>
    %15 = arith.addf %8, %14 : vector<16x128xf32>
    %cst_8 = arith.constant 0.797884583 : f32
    %16 = vector.broadcast %cst_8 : f32 to vector<16x128xf32>
    %17 = arith.mulf %16, %15 : vector<16x128xf32>
    %18 = math.tanh %17 : vector<16x128xf32>
    %cst_9 = arith.constant 1.000000e+00 : f32
    %19 = vector.broadcast %cst_9 : f32 to vector<16x128xf32>
    %20 = arith.addf %19, %18 : vector<16x128xf32>
    %21 = arith.mulf %10, %20 : vector<16x128xf32>
    %c0_10 = arith.constant 0 : index
    %c0_11 = arith.constant 0 : index
    %22 = vector.load %arg8[%c0_10, %c0_11] : memref<16x128xf32, #tpu.memory_space<vmem>>, vector<16x128xf32>
    %23 = arith.truncf %21 : vector<16x128xf32> to vector<16x128xbf16>
    %c0_12 = arith.constant 0 : index
    %c0_13 = arith.constant 0 : index
    %24 = vector.load %arg5[%c0_12, %c0_13] : memref<128x128xbf16, #tpu.memory_space<vmem>>, vector<128x128xbf16>
    %cst_14 = arith.constant dense<0.000000e+00> : vector<16x128xf32>
    %25 = tpu.matmul %23, %24, %cst_14 {dimension_numbers = #tpu.dot_dimension_numbers<[1], [0], [0], [1], [0, 0, 1, 1], [], []>} : vector<16x128xbf16>, vector<128x128xbf16>, vector<16x128xf32> -> vector<16x128xf32>
    %26 = arith.addf %22, %25 : vector<16x128xf32>
    %c0_15 = arith.constant 0 : index
    %c0_16 = arith.constant 0 : index
    %27 = vector.load %arg8[%c0_15, %c0_16] : memref<16x128xf32, #tpu.memory_space<vmem>>, vector<16x128xf32>
    tpu.vector_store %arg8[%c0_15, %c0_16], %26 {strides = array<i32>} : memref<16x128xf32, #tpu.memory_space<vmem>>, vector<16x128xf32>,
    %c0_i32_17 = arith.constant 0 : i32
    %28 = arith.cmpi eq, %arg1, %c0_i32_17 : i32
    %29 = arith.extui %28 : i1 to i32
    %c0_i32_18 = arith.constant 0 : i32
    %30 = arith.cmpi ne, %29, %c0_i32_18 : i32
    scf.if %30 {
      %c0_19 = arith.constant 0 : index
      %c0_20 = arith.constant 0 : index
      %31 = vector.load %arg8[%c0_19, %c0_20] : memref<16x128xf32, #tpu.memory_space<vmem>>, vector<16x128xf32>
      %c0_21 = arith.constant 0 : index
      %c0_22 = arith.constant 0 : index
      %32 = vector.load %arg7[%c0_21, %c0_22] : memref<16x128xf32, #tpu.memory_space<vmem>>, vector<16x128xf32>
      tpu.vector_store %arg7[%c0_21, %c0_22], %31 {strides = array<i32>} : memref<16x128xf32, #tpu.memory_space<vmem>>, vector<16x128xf32>,
    } else {
    }
    return
  }
  func.func @transform_0(%arg0: i32, %arg1: i32) -> (i32, i32) {
    %c0_i32 = arith.constant 0 : i32
    %c0_i32_0 = arith.constant 0 : i32
    return %arg0, %c0_i32 : i32, i32
  }
  func.func @transform_1(%arg0: i32, %arg1: i32) -> (i32, i32) {
    %c0_i32 = arith.constant 0 : i32
    %c0_i32_0 = arith.constant 0 : i32
    return %c0_i32, %arg1 : i32, i32
  }
  func.func @transform_2(%arg0: i32, %arg1: i32) -> (i32, i32) {
    %c0_i32 = arith.constant 0 : i32
    %c0_i32_0 = arith.constant 0 : i32
    return %c0_i32, %arg1 : i32, i32
  }
  func.func @transform_3(%arg0: i32, %arg1: i32) -> (i32, i32) {
    %c0_i32 = arith.constant 0 : i32
    %c0_i32_0 = arith.constant 0 : i32
    return %arg1, %c0_i32 : i32, i32
  }
  func.func @transform_4(%arg0: i32, %arg1: i32) -> (i32, i32) {
    %c0_i32 = arith.constant 0 : i32
    %c0_i32_0 = arith.constant 0 : i32
    %c0_i32_1 = arith.constant 0 : i32
    return %c0_i32, %c0_i32_0 : i32, i32
  }
  func.func @transform_5(%arg0: i32, %arg1: i32) -> (i32, i32) {
    %c0_i32 = arith.constant 0 : i32
    %c0_i32_0 = arith.constant 0 : i32
    return %arg0, %c0_i32 : i32, i32
  }
}

</mosaic_0001>

<llo_original>
// kernel: tpu_custom_call.1
$region0: #{tpu_custom_call.1}
  #allocation0 [shape = 'u32[]', space=smem, size = 0x4, offset = 0x4, fixed_abs, tag = 'smem constant byte address 0x4 - core index']
  #allocation1 [shape = 'u32[144,128]{1,0:T(1,128)}', space=vmem, size = 0x12000, scoped, tag = 'internal scratch']
  #allocation2 [shape = 'f32[16,128]{1,0:T(8,128)}', space=vmem, size = 0x2000, scoped, tag = 'scratch operand']
  %s0 = inlined_call_operand.hbm [shape: bf16[16,128], index: 0, kind: input, shape index: {}]
  %s1 = inlined_call_operand.hbm [shape: bf16[128,128], index: 1, kind: input, shape index: {}]
  %s2 = inlined_call_operand.vmem [shape: f32[1,128], index: 2, kind: input, shape index: {}]
  %s3 = inlined_call_operand.hbm [shape: bf16[128,128], index: 3, kind: input, shape index: {}]
  %s4 = inlined_call_operand.vmem [shape: f32[1,128], index: 4, kind: input, shape index: {}]
  %s5 = inlined_call_operand.hbm [shape: f32[16,128], index: 5, kind: output, shape index: {}]
  %s6 = sld [smem:[#allocation0]]
  $region50: #{tpu_custom_call.1} parent=0
    _
  %s8 = ssub.s32 1, %s6
  %s9 = scalar_select 0, %s8, %s6
  $region1: #{tpu_custom_call.1} parent=0
    #allocation3 [shape = 'u8[4096]{0}', space=vmem, size = 0x1000, scoped, tag = 'input window, operand 0, single buffered']
    #allocation4 [shape = 's32[1]{0}', space=sflag, size = 0x4, scoped, tag = 'scoped memory for tpu_custom_call.1']
    #allocation5 [shape = 's32[1]{0}', space=sflag, size = 0x4, scoped, tag = 'scoped memory for tpu_custom_call.1']
    #allocation6 [shape = 'u8[32768]{0}', space=vmem, size = 0x8000, scoped, tag = 'input window, operand 1, single buffered']
    #allocation7 [shape = 's32[1]{0}', space=sflag, size = 0x4, scoped, tag = 'scoped memory for tpu_custom_call.1']
    #allocation8 [shape = 'u8[32768]{0}', space=vmem, size = 0x8000, scoped, tag = 'input window, operand 3, single buffered']
    #allocation9 [shape = 'u8[8192]{0}', space=vmem, size = 0x2000, scoped, tag = 'output window, operand 0, single buffered']
    %10 = vsyncpa [#allocation4], 0
    %11 = vsyncpa [#allocation7], 0
    %12 = vsyncpa [#allocation5], 0
    // Predicated region
    $region2: #{tpu_custom_call.1} parent=1 // pred_check
      _
    $region3: #{tpu_custom_call.1} parent=1 // pred_check_branch
      %14 = sbr.rel (0) target = $region5
    $region4: #{tpu_custom_call.1} parent=1 // pred_region
      %s16 = ssub.s32 128, 128
      %17 = vsyncadd [#allocation4], %s16
      %s18 = sshll.u32 [#allocation3], 4
      %s19 = int_to_ptr.vmem [resolvable:$true] %s18
      %24 = dma.hbm_to_vmem [thread:$0]  %s0, 128, %s19, [#allocation4], 64, 64, 4
    $region5: #{tpu_custom_call.1} parent=1 // pred_fallthru
      _
    // Predicated region
    $region6: #{tpu_custom_call.1} parent=1 // pred_check
      _
    $region7: #{tpu_custom_call.1} parent=1 // pred_check_branch
      %26 = sbr.rel (0) target = $region9
    $region8: #{tpu_custom_call.1} parent=1 // pred_region
      %s28 = ssub.s32 1024, 1024
      %29 = vsyncadd [#allocation7], %s28
      %s30 = sshll.u32 [#allocation6], 4
      %s31 = int_to_ptr.vmem [resolvable:$true] %s30
      %36 = dma.hbm_to_vmem [thread:$0]  %s1, 1024, %s31, [#allocation7], 64, 64, 4
    $region9: #{tpu_custom_call.1} parent=1 // pred_fallthru
      _
    // Predicated region
    $region10: #{tpu_custom_call.1} parent=1 // pred_check
      _
    $region11: #{tpu_custom_call.1} parent=1 // pred_check_branch
      %38 = sbr.rel (0) target = $region13
    $region12: #{tpu_custom_call.1} parent=1 // pred_region
      _
    $region13: #{tpu_custom_call.1} parent=1 // pred_fallthru
      _
    // Predicated region
    $region14: #{tpu_custom_call.1} parent=1 // pred_check
      _
    $region15: #{tpu_custom_call.1} parent=1 // pred_check_branch
      %40 = sbr.rel (0) target = $region17
    $region16: #{tpu_custom_call.1} parent=1 // pred_region
      %s42 = ssub.s32 1024, 1024
      %43 = vsyncadd [#allocation7], %s42
      %s44 = sshll.u32 [#allocation8], 4
      %s45 = int_to_ptr.vmem [resolvable:$true] %s44
      %50 = dma.hbm_to_vmem [thread:$0]  %s3, 1024, %s45, [#allocation7], 64, 64, 4
    $region17: #{tpu_custom_call.1} parent=1 // pred_fallthru
      _
    // Predicated region
    $region18: #{tpu_custom_call.1} parent=1 // pred_check
      _
    $region19: #{tpu_custom_call.1} parent=1 // pred_check_branch
      %52 = sbr.rel (0) target = $region21
    $region20: #{tpu_custom_call.1} parent=1 // pred_region
      _
    $region21: #{tpu_custom_call.1} parent=1 // pred_fallthru
      _
    // Predicated region
    $region22: #{tpu_custom_call.1} parent=1 // pred_check
      _
    $region23: #{tpu_custom_call.1} parent=1 // pred_check_branch
      %54 = sbr.rel (0) target = $region25
    $region24: #{tpu_custom_call.1} parent=1 // pred_region
      %55 = dma.done [#allocation4], 128
    $region25: #{tpu_custom_call.1} parent=1 // pred_fallthru
      _
    // Predicated region
    $region26: #{tpu_custom_call.1} parent=1 // pred_check
      _
    $region27: #{tpu_custom_call.1} parent=1 // pred_check_branch
      %57 = sbr.rel (0) target = $region29
    $region28: #{tpu_custom_call.1} parent=1 // pred_region
      %58 = dma.done [#allocation7], 1024
    $region29: #{tpu_custom_call.1} parent=1 // pred_fallthru
      _
    // Predicated region
    $region30: #{tpu_custom_call.1} parent=1 // pred_check
      _
    $region31: #{tpu_custom_call.1} parent=1 // pred_check_branch
      %60 = sbr.rel (0) target = $region33
    $region32: #{tpu_custom_call.1} parent=1 // pred_region
      %61 = dma.done [#allocation7], 1024
    $region33: #{tpu_custom_call.1} parent=1 // pred_fallthru
      _
    %p63 = scmp.eq.s32.totalorder 0, 0
    // Predicated region
    $region34: #{tpu_custom_call.1} parent=1 // pred_check
      %p64 = pneg %p63
    $region35: #{tpu_custom_call.1} parent=1 // pred_check_branch
      %66 = sbr.rel (%p64) target = $region37
    $region36: #{tpu_custom_call.1} parent=1 // pred_region
      %v67 = vld [vmem:[%s4] sm:$0x1]
      %v69 = vlaneseq
      %v70 = vshrl.u32 %v69, 7
      %v71 = vsub.s32 0, %v70
      %v72 = vrot.slane %v67, %v71
      %74 = vst [vmem:[#allocation2] sm:$0xff] %v72
      %75 = vst [vmem:[#allocation2 + $0x8] sm:$0xff] %v72
    $region37: #{tpu_custom_call.1} parent=1 // pred_fallthru
      _
    %v76 = vld [vmem:[#allocation3] sm:$0xf]
    %v77 = vld [vmem:[#allocation3 + $0x4] sm:$0xf]
    %v78 = vld [vmem:[#allocation6] sm:$0xf]
    %v79 = vld [vmem:[#allocation6 + $0x4] sm:$0xf]
    %v80 = vld [vmem:[#allocation6 + $0x8] sm:$0xf]
    %v81 = vld [vmem:[#allocation6 + $0xc] sm:$0xf]
    %v82 = vld [vmem:[#allocation6 + $0x10] sm:$0xf]
    %v83 = vld [vmem:[#allocation6 + $0x14] sm:$0xf]
    %v84 = vld [vmem:[#allocation6 + $0x18] sm:$0xf]
    %v85 = vld [vmem:[#allocation6 + $0x1c] sm:$0xf]
    %v86 = vld [vmem:[#allocation6 + $0x20] sm:$0xf]
    %v87 = vld [vmem:[#allocation6 + $0x24] sm:$0xf]
    %v88 = vld [vmem:[#allocation6 + $0x28] sm:$0xf]
    %v89 = vld [vmem:[#allocation6 + $0x2c] sm:$0xf]
    %v90 = vld [vmem:[#allocation6 + $0x30] sm:$0xf]
    %v91 = vld [vmem:[#allocation6 + $0x34] sm:$0xf]
    %v92 = vld [vmem:[#allocation6 + $0x38] sm:$0xf]
    %v93 = vld [vmem:[#allocation6 + $0x3c] sm:$0xf]
    %v94 = vld [vmem:[%s2] sm:$0x1]
    %v96 = vlaneseq
    %v97 = vshrl.u32 %v96, 7
    %v98 = vsub.s32 0, %v97
    %v99 = vrot.slane %v94, %v98
    %v103 = vunpack.c.l.b16 %v76
    %v104 = vunpack.c.l.b16 %v77
    %v105 = vpack.c.b16 %v104, %v103
    %v123 = vunpack.c.l.b16 %v78
    %v124 = vunpack.c.l.b16 %v79
    %v125 = vunpack.c.l.b16 %v80
    %v126 = vunpack.c.l.b16 %v81
    %v127 = vunpack.c.l.b16 %v82
    %v128 = vunpack.c.l.b16 %v83
    %v129 = vunpack.c.l.b16 %v84
    %v130 = vunpack.c.l.b16 %v85
    %v131 = vunpack.c.l.b16 %v86
    %v132 = vunpack.c.l.b16 %v87
    %v133 = vunpack.c.l.b16 %v88
    %v134 = vunpack.c.l.b16 %v89
    %v135 = vunpack.c.l.b16 %v90
    %v136 = vunpack.c.l.b16 %v91
    %v137 = vunpack.c.l.b16 %v92
    %v138 = vunpack.c.l.b16 %v93
    %v139 = vpack.c.b16 %v124, %v123
    %v140 = vpack.c.b16 %v126, %v125
    %v141 = vpack.c.b16 %v128, %v127
    %v142 = vpack.c.b16 %v130, %v129
    %v143 = vpack.c.b16 %v132, %v131
    %v144 = vpack.c.b16 %v134, %v133
    %v145 = vpack.c.b16 %v136, %v135
    %v146 = vpack.c.b16 %v138, %v137
    %155 = vmatprep.subr.bf16.mxu0 0
    %156 = vmatpush1.bf16.msra.mxu0 %v139
    %157 = vmatprep.subr.bf16.mxu0 0
    %158 = vmatpush1.bf16.msra.mxu0 %v140
    %159 = vmatprep.subr.bf16.mxu0 0
    %160 = vmatpush1.bf16.msra.mxu0 %v141
    %161 = vmatprep.subr.bf16.mxu0 0
    %162 = vmatpush1.bf16.msra.mxu0 %v142
    %163 = vmatprep.subr.bf16.mxu0 0
    %164 = vmatpush1.bf16.msra.mxu0 %v143
    %165 = vmatprep.subr.bf16.mxu0 0
    %166 = vmatpush1.bf16.msra.mxu0 %v144
    %167 = vmatprep.subr.bf16.mxu0 0
    %168 = vmatpush1.bf16.msra.mxu0 %v145
    %169 = vmatprep.subr.bf16.mxu0 0
    %170 = vmatpush1.bf16.msra.mxu0 %v146
    %171 = vmatprep.subr.bf16.mxu0 0
    %172 = vmatpush1.bf16.msra.mxu0 0
    %173 = vmatprep.subr.bf16.mxu0 0
    %174 = vmatpush1.bf16.msra.mxu0 0
    %175 = vmatprep.subr.bf16.mxu0 0
    %176 = vmatpush1.bf16.msra.mxu0 0
    %177 = vmatprep.subr.bf16.mxu0 0
    %178 = vmatpush1.bf16.msra.mxu0 0
    %179 = vmatprep.subr.bf16.mxu0 0
    %180 = vmatpush1.bf16.msra.mxu0 0
    %181 = vmatprep.subr.bf16.mxu0 0
    %182 = vmatpush1.bf16.msra.mxu0 0
    %183 = vmatprep.subr.bf16.mxu0 0
    %184 = vmatpush1.bf16.msra.mxu0 0
    %185 = vmatprep.subr.bf16.mxu0 0
    %186 = vmatpush1.bf16.msra.mxu0 0
    %187 = vmatprep.mubr.bf16.mxu0 0
    %188 = vmatmul.mubr.bf16.gmra.mrb[0].mxu0 %v105
    %v189 = vpop.f32.mrb[0].mxu0
    %v190 = vadd.f32 %v99, %v189
    %v191 = vpop.f32.mrb[0].mxu0
    %v192 = vpop.f32.mrb[0].mxu0
    %v193 = vadd.f32 %v99, %v192
    %v194 = vpop.f32.mrb[0].mxu0
    %195 = vdwg.mxu0
    %v196 = vmul.f32 %v190, 0.5
    %v197 = vmul.f32 %v193, 0.5
    %v198 = vmul.f32 %v190, 0.044715
    %v199 = vmul.f32 %v193, 0.044715
    %v200 = vmul.f32 %v198, %v190
    %v201 = vmul.f32 %v199, %v193
    %v202 = vmul.f32 %v200, %v190
    %v203 = vmul.f32 %v201, %v193
    %v204 = vadd.f32 %v190, %v202
    %v205 = vadd.f32 %v193, %v203
    %v206 = vmul.f32 %v204, 0.7978846
    %v207 = vmul.f32 %v205, 0.7978846
    %v208 = vtanh.pop %v206
    %v209 = vtanh.pop %v207
    %v210 = vadd.f32 %v208, 1.0
    %v211 = vadd.f32 %v209, 1.0
    %v212 = vmul.f32 %v196, %v210
    %v213 = vmul.f32 %v197, %v211
    %v214 = vld [vmem:[#allocation2] sm:$0xff]
    %v215 = vld [vmem:[#allocation2 + $0x8] sm:$0xff]
    %v216 = vpack.c.bf16 %v213, %v212
    %v217 = vld [vmem:[#allocation8] sm:$0xf]
    %v218 = vld [vmem:[#allocation8 + $0x4] sm:$0xf]
    %v219 = vld [vmem:[#allocation8 + $0x8] sm:$0xf]
    %v220 = vld [vmem:[#allocation8 + $0xc] sm:$0xf]
    %v221 = vld [vmem:[#allocation8 + $0x10] sm:$0xf]
    %v222 = vld [vmem:[#allocation8 + $0x14] sm:$0xf]
    %v223 = vld [vmem:[#allocation8 + $0x18] sm:$0xf]
    %v224 = vld [vmem:[#allocation8 + $0x1c] sm:$0xf]
    %v225 = vld [vmem:[#allocation8 + $0x20] sm:$0xf]
    %v226 = vld [vmem:[#allocation8 + $0x24] sm:$0xf]
    %v227 = vld [vmem:[#allocation8 + $0x28] sm:$0xf]
    %v228 = vld [vmem:[#allocation8 + $0x2c] sm:$0xf]
    %v229 = vld [vmem:[#allocation8 + $0x30] sm:$0xf]
    %v230 = vld [vmem:[#allocation8 + $0x34] sm:$0xf]
    %v231 = vld [vmem:[#allocation8 + $0x38] sm:$0xf]
    %v232 = vld [vmem:[#allocation8 + $0x3c] sm:$0xf]
    %v249 = vunpack.c.l.b16 %v217
    %v250 = vunpack.c.l.b16 %v218
    %v251 = vunpack.c.l.b16 %v219
    %v252 = vunpack.c.l.b16 %v220
    %v253 = vunpack.c.l.b16 %v221
    %v254 = vunpack.c.l.b16 %v222
    %v255 = vunpack.c.l.b16 %v223
    %v256 = vunpack.c.l.b16 %v224
    %v257 = vunpack.c.l.b16 %v225
    %v258 = vunpack.c.l.b16 %v226
    %v259 = vunpack.c.l.b16 %v227
    %v260 = vunpack.c.l.b16 %v228
    %v261 = vunpack.c.l.b16 %v229
    %v262 = vunpack.c.l.b16 %v230
    %v263 = vunpack.c.l.b16 %v231
    %v264 = vunpack.c.l.b16 %v232
    %v265 = vpack.c.b16 %v250, %v249
    %v266 = vpack.c.b16 %v252, %v251
    %v267 = vpack.c.b16 %v254, %v253
    %v268 = vpack.c.b16 %v256, %v255
    %v269 = vpack.c.b16 %v258, %v257
    %v270 = vpack.c.b16 %v260, %v259
    %v271 = vpack.c.b16 %v262, %v261
    %v272 = vpack.c.b16 %v264, %v263
    %281 = vmatprep.subr.bf16.mxu0 0
    %282 = vmatpush1.bf16.msra.mxu0 %v265
    %283 = vmatprep.subr.bf16.mxu0 0
    %284 = vmatpush1.bf16.msra.mxu0 %v266
    %285 = vmatprep.subr.bf16.mxu0 0
    %286 = vmatpush1.bf16.msra.mxu0 %v267
    %287 = vmatprep.subr.bf16.mxu0 0
    %288 = vmatpush1.bf16.msra.mxu0 %v268
    %289 = vmatprep.subr.bf16.mxu0 0
    %290 = vmatpush1.bf16.msra.mxu0 %v269
    %291 = vmatprep.subr.bf16.mxu0 0
    %292 = vmatpush1.bf16.msra.mxu0 %v270
    %293 = vmatprep.subr.bf16.mxu0 0
    %294 = vmatpush1.bf16.msra.mxu0 %v271
    %295 = vmatprep.subr.bf16.mxu0 0
    %296 = vmatpush1.bf16.msra.mxu0 %v272
    %297 = vmatprep.subr.bf16.mxu0 0
    %298 = vmatpush1.bf16.msra.mxu0 0
    %299 = vmatprep.subr.bf16.mxu0 0
    %300 = vmatpush1.bf16.msra.mxu0 0
    %301 = vmatprep.subr.bf16.mxu0 0
    %302 = vmatpush1.bf16.msra.mxu0 0
    %303 = vmatprep.subr.bf16.mxu0 0
    %304 = vmatpush1.bf16.msra.mxu0 0
    %305 = vmatprep.subr.bf16.mxu0 0
    %306 = vmatpush1.bf16.msra.mxu0 0
    %307 = vmatprep.subr.bf16.mxu0 0
    %308 = vmatpush1.bf16.msra.mxu0 0
    %309 = vmatprep.subr.bf16.mxu0 0
    %310 = vmatpush1.bf16.msra.mxu0 0
    %311 = vmatprep.subr.bf16.mxu0 0
    %312 = vmatpush1.bf16.msra.mxu0 0
    %313 = vmatprep.mubr.bf16.mxu0 0
    %314 = vmatmul.mubr.bf16.gmra.mrb[0].mxu0 %v216
    %v315 = vpop.f32.mrb[0].mxu0
    %v316 = vadd.f32 0.0, %v315
    %v317 = vpop.f32.mrb[0].mxu0
    %v318 = vpop.f32.mrb[0].mxu0
    %v319 = vadd.f32 0.0, %v318
    %v320 = vpop.f32.mrb[0].mxu0
    %321 = vdwg.mxu0
    %v322 = vadd.f32 %v214, %v316
    %v323 = vadd.f32 %v215, %v319
    %324 = vst [vmem:[#allocation2] sm:$0xff] %v322
    %325 = vst [vmem:[#allocation2 + $0x8] sm:$0xff] %v323
    // Predicated region
    $region38: #{tpu_custom_call.1} parent=1 // pred_check
      %p326 = pneg %p63
    $region39: #{tpu_custom_call.1} parent=1 // pred_check_branch
      %328 = sbr.rel (%p326) target = $region41
    $region40: #{tpu_custom_call.1} parent=1 // pred_region
      %v329 = vld [vmem:[#allocation2] sm:$0xff]
      %v330 = vld [vmem:[#allocation2 + $0x8] sm:$0xff]
      %331 = vst [vmem:[#allocation9] sm:$0xff] %v329
      %332 = vst [vmem:[#allocation9 + $0x8] sm:$0xff] %v330
    $region41: #{tpu_custom_call.1} parent=1 // pred_fallthru
      _
    // Predicated region
    $region42: #{tpu_custom_call.1} parent=1 // pred_check
      _
    $region43: #{tpu_custom_call.1} parent=1 // pred_check_branch
      %334 = sbr.rel (0) target = $region45
    $region44: #{tpu_custom_call.1} parent=1 // pred_region
      %s336 = ssub.s32 256, 256
      %337 = vsyncadd [#allocation5], %s336
      %s338 = sshll.u32 [#allocation9], 4
      %s339 = int_to_ptr.vmem [resolvable:$true] %s338
      %344 = dma.vmem_to_hbm [thread:$0]  %s339, 256, %s5, [#allocation5], 128, 128, 8
    $region45: #{tpu_custom_call.1} parent=1 // pred_fallthru
      _
    // Predicated region
    $region46: #{tpu_custom_call.1} parent=1 // pred_check
      _
    $region47: #{tpu_custom_call.1} parent=1 // pred_check_branch
      %346 = sbr.rel (0) target = $region49
    $region48: #{tpu_custom_call.1} parent=1 // pred_region
      %347 = dma.done [#allocation5], 256
    $region49: #{tpu_custom_call.1} parent=1 // pred_fallthru
      _
    %348 = vsyncpa [#allocation4], 1
    %349 = vsyncpa [#allocation7], 1
    %350 = vsyncpa [#allocation5], 1

</llo_original>
